<compile_context>
chip_gen: v5e
topology: v5e:2x2
jax: 0.10.0
libtpu: 0.0.40
codegen_flags: <defaults>
</compile_context>

<pallas_src>
import jax
import jax.numpy as jnp
from jax.experimental import pallas as pl
from jax.experimental.pallas import tpu as pltpu

_LANES = 128
_MAX_TILE_LANES = 64 * 1024   # per-step lane tile cap (~8.4 MiB double-buffered VMEM)


def _cdiv(a, b):
    return -(-a // b)


def _round_up(n, m):
    return ((n + m - 1) // m) * m


def _choose_tile(batch):
    """Balanced, 128-aligned lane tiles; >=2 grid steps once the batch is non-trivial."""
    if batch <= 2 * _LANES:
        # Single block spanning the whole array (block dim == full dim is legal).
        return batch, 1
    n_tiles = max(2, _cdiv(batch, _MAX_TILE_LANES))   # >=2 steps -> both v7x TCs busy
    tile = _round_up(_cdiv(batch, n_tiles), _LANES)
    n_tiles = _cdiv(batch, tile)
    return tile, n_tiles


def mlp_kernel(xT_ref, w1_ref, b1_ref, w2_ref, b2_ref, oT_ref):
    """Activations-on-lanes MLP.

    xT_ref : VMEM (K, tile)  -- lane-dense batch rows of x^T
    w1_ref : SMEM (K, H)     b1_ref : SMEM (H,)
    w2_ref : SMEM (H, C)     b2_ref : SMEM (C,)
    oT_ref : VMEM (C, tile)  -- lane-dense batch rows of out^T
    """
    k_dim = w1_ref.shape[0]   # 3
    h_dim = w1_ref.shape[1]   # 10
    c_dim = w2_ref.shape[1]   # 6

    # Lane-dense input rows, (1, tile) each.
    x_rows = [xT_ref[k:k + 1, :] for k in range(k_dim)]

    # ---- Layer 1 + ReLU: one lane-dense row of h^T per hidden unit ----
    # scalar (SMEM) * vector FMAs; bias folded into the accumulator init.
    h_rows = []
    for j in range(h_dim):
        acc = x_rows[0] * w1_ref[0, j] + b1_ref[j]
        for k in range(1, k_dim):
            acc = acc + x_rows[k] * w1_ref[k, j]
        h_rows.append(jnp.maximum(acc, 0.0))

    # ---- Layer 2: one lane-dense row of out^T per class; compact store ----
    for c in range(c_dim):
        acc = h_rows[0] * w2_ref[0, c] + b2_ref[c]
        for j in range(1, h_dim):
            acc = acc + h_rows[j] * w2_ref[j, c]
        oT_ref[c:c + 1, :] = acc.astype(oT_ref.dtype)


def mlp_forward(x, w1, b1, w2, b2, *, min_pallas_batch=1024):
    """x: (B, hid_dim); w1: (hid_dim, H); b1: (H,); w2: (H, C); b2: (C,). Returns (B, C)."""
    x = x.astype(jnp.float32)
    w1 = w1.astype(jnp.float32)
    b1 = b1.astype(jnp.float32)
    w2 = w2.astype(jnp.float32)
    b2 = b2.astype(jnp.float32)

    B, K = x.shape
    H = w1.shape[1]
    C = w2.shape[1]

    # Small-batch bypass: plain XLA fusion always wins at tiny batch sizes.
    if B < min_pallas_batch:
        return jnp.maximum(x @ w1 + b1[None, :], 0.0) @ w2 + b2[None, :]

    xT = x.T                                   # (K, B): batch on the lane axis
    tile, n_tiles = _choose_tile(B)
    grid = (n_tiles,)

    # Accurate (unpadded) advisory cost.
    flops = 2 * B * (K * H + H * C)
    bytes_accessed = 4 * (B * K + B * C + K * H + H + H * C + C)

    outT = pl.pallas_call(
        mlp_kernel,
        out_shape=jax.ShapeDtypeStruct((C, B), jnp.float32),
        grid=grid,
        in_specs=[
            # Activations: lane-tiled, ragged tail block masked by Pallas.
            pl.BlockSpec((K, tile), lambda i: (0, i)),
            # Tiny weight/bias tables: whole arrays resident in SMEM, read as scalars.
            pl.BlockSpec(memory_space=pltpu.MemorySpace.SMEM),
            pl.BlockSpec(memory_space=pltpu.MemorySpace.SMEM),
            pl.BlockSpec(memory_space=pltpu.MemorySpace.SMEM),
            pl.BlockSpec(memory_space=pltpu.MemorySpace.SMEM),
        ],
        # Compact, lane-dense output: exactly C rows of B lanes (no 128-lane padding).
        out_specs=pl.BlockSpec((C, tile), lambda i: (0, i)),
        compiler_params=pltpu.CompilerParams(
            dimension_semantics=("parallel",),   # independent batch tiles; >=2 steps
        ),
        cost_estimate=pl.CostEstimate(
            flops=flops, transcendentals=0, bytes_accessed=bytes_accessed),
    )(xT, w1, b1, w2, b2)

    return outT.T                               # (B, C)


if __name__ == "__main__":
    # Config values from TrainModelConfig
    hid_dim = 3
    large_hid_dim = 10
    class_num = 6
    batch_size = 20

    key = jax.random.PRNGKey(0)
    kx, kw1, kb1, kw2, kb2 = jax.random.split(key, 5)

    # Deterministic nn.Linear-style init, stored in (in, out) layout
    # (transpose of PyTorch's (out, in)); biases are 1-D like PyTorch.
    bound1 = 1.0 / jnp.sqrt(hid_dim)
    bound2 = 1.0 / jnp.sqrt(large_hid_dim)
    w1 = jax.random.uniform(kw1, (hid_dim, large_hid_dim), jnp.float32, -bound1, bound1)
    b1 = jax.random.uniform(kb1, (large_hid_dim,), jnp.float32, -bound1, bound1)
    w2 = jax.random.uniform(kw2, (large_hid_dim, class_num), jnp.float32, -bound2, bound2)
    b2 = jax.random.uniform(kb2, (class_num,), jnp.float32, -bound2, bound2)

    x = jax.random.normal(kx, (batch_size, hid_dim), jnp.float32)

    # Force the Pallas path (min_pallas_batch=0) so the kernel itself runs; in
    # production the default threshold routes tiny batches to plain XLA.
    out = mlp_forward(x, w1, b1, w2, b2, min_pallas_batch=0)
    out = jax.block_until_ready(out)

    # Pure-JAX reference check
    ref = jnp.maximum(x @ w1 + b1[None, :], 0.0) @ w2 + b2[None, :]
    assert out.shape == (batch_size, class_num)
    assert jnp.allclose(out, ref, atol=1e-5, rtol=1e-5)

    print("KERNEL_OK")
</pallas_src>

<mosaic_0001>
module attributes {stable_mosaic.version = 11 : i64} {
  func.func @mlp_kernel(%arg0: i32, %arg1: memref<3x20xf32, #tpu.memory_space<vmem>>, %arg2: memref<3x10xf32, #tpu.memory_space<smem>>, %arg3: memref<10xf32, #tpu.memory_space<smem>>, %arg4: memref<10x6xf32, #tpu.memory_space<smem>>, %arg5: memref<6xf32, #tpu.memory_space<smem>>, %arg6: memref<6x20xf32, #tpu.memory_space<vmem>>) attributes {dimension_semantics = [#tpu.dimension_semantics<parallel>], iteration_bounds = array<i64: 1>, scalar_prefetch = 0 : i64, scratch_operands = 0 : i64, tpu.core_type = #tpu.core_type<tc>, window_params = [{transform_indices = @transform_0, window_bounds = array<i64: 3, 20>}, {transform_indices = @transform_1, window_bounds = array<i64: 3, 10>}, {transform_indices = @transform_2, window_bounds = array<i64: 10>}, {transform_indices = @transform_3, window_bounds = array<i64: 10, 6>}, {transform_indices = @transform_4, window_bounds = array<i64: 6>}, {transform_indices = @transform_5, window_bounds = array<i64: 6, 20>}]} {
    %c0 = arith.constant 0 : index
    %c0_0 = arith.constant 0 : index
    %0 = vector.load %arg1[%c0, %c0_0] : memref<3x20xf32, #tpu.memory_space<vmem>>, vector<1x20xf32>
    %c1 = arith.constant 1 : index
    %c0_1 = arith.constant 0 : index
    %1 = vector.load %arg1[%c1, %c0_1] : memref<3x20xf32, #tpu.memory_space<vmem>>, vector<1x20xf32>
    %c2 = arith.constant 2 : index
    %c0_2 = arith.constant 0 : index
    %2 = vector.load %arg1[%c2, %c0_2] : memref<3x20xf32, #tpu.memory_space<vmem>>, vector<1x20xf32>
    %c0_3 = arith.constant 0 : index
    %c0_4 = arith.constant 0 : index
    %3 = memref.load %arg2[%c0_3, %c0_4] : memref<3x10xf32, #tpu.memory_space<smem>>
    %4 = vector.broadcast %3 : f32 to vector<1x20xf32>
    %5 = arith.mulf %0, %4 : vector<1x20xf32>
    %c0_5 = arith.constant 0 : index
    %6 = memref.load %arg3[%c0_5] : memref<10xf32, #tpu.memory_space<smem>>
    %7 = vector.broadcast %6 : f32 to vector<1x20xf32>
    %8 = arith.addf %5, %7 : vector<1x20xf32>
    %c1_6 = arith.constant 1 : index
    %c0_7 = arith.constant 0 : index
    %9 = memref.load %arg2[%c1_6, %c0_7] : memref<3x10xf32, #tpu.memory_space<smem>>
    %10 = vector.broadcast %9 : f32 to vector<1x20xf32>
    %11 = arith.mulf %1, %10 : vector<1x20xf32>
    %12 = arith.addf %8, %11 : vector<1x20xf32>
    %c2_8 = arith.constant 2 : index
    %c0_9 = arith.constant 0 : index
    %13 = memref.load %arg2[%c2_8, %c0_9] : memref<3x10xf32, #tpu.memory_space<smem>>
    %14 = vector.broadcast %13 : f32 to vector<1x20xf32>
    %15 = arith.mulf %2, %14 : vector<1x20xf32>
    %16 = arith.addf %12, %15 : vector<1x20xf32>
    %cst = arith.constant 0.000000e+00 : f32
    %17 = vector.broadcast %cst : f32 to vector<1x20xf32>
    %18 = arith.maximumf %16, %17 : vector<1x20xf32>
    %c0_10 = arith.constant 0 : index
    %c1_11 = arith.constant 1 : index
    %19 = memref.load %arg2[%c0_10, %c1_11] : memref<3x10xf32, #tpu.memory_space<smem>>
    %20 = vector.broadcast %19 : f32 to vector<1x20xf32>
    %21 = arith.mulf %0, %20 : vector<1x20xf32>
    %c1_12 = arith.constant 1 : index
    %22 = memref.load %arg3[%c1_12] : memref<10xf32, #tpu.memory_space<smem>>
    %23 = vector.broadcast %22 : f32 to vector<1x20xf32>
    %24 = arith.addf %21, %23 : vector<1x20xf32>
    %c1_13 = arith.constant 1 : index
    %c1_14 = arith.constant 1 : index
    %25 = memref.load %arg2[%c1_13, %c1_14] : memref<3x10xf32, #tpu.memory_space<smem>>
    %26 = vector.broadcast %25 : f32 to vector<1x20xf32>
    %27 = arith.mulf %1, %26 : vector<1x20xf32>
    %28 = arith.addf %24, %27 : vector<1x20xf32>
    %c2_15 = arith.constant 2 : index
    %c1_16 = arith.constant 1 : index
    %29 = memref.load %arg2[%c2_15, %c1_16] : memref<3x10xf32, #tpu.memory_space<smem>>
    %30 = vector.broadcast %29 : f32 to vector<1x20xf32>
    %31 = arith.mulf %2, %30 : vector<1x20xf32>
    %32 = arith.addf %28, %31 : vector<1x20xf32>
    %cst_17 = arith.constant 0.000000e+00 : f32
    %33 = vector.broadcast %cst_17 : f32 to vector<1x20xf32>
    %34 = arith.maximumf %32, %33 : vector<1x20xf32>
    %c0_18 = arith.constant 0 : index
    %c2_19 = arith.constant 2 : index
    %35 = memref.load %arg2[%c0_18, %c2_19] : memref<3x10xf32, #tpu.memory_space<smem>>
    %36 = vector.broadcast %35 : f32 to vector<1x20xf32>
    %37 = arith.mulf %0, %36 : vector<1x20xf32>
    %c2_20 = arith.constant 2 : index
    %38 = memref.load %arg3[%c2_20] : memref<10xf32, #tpu.memory_space<smem>>
    %39 = vector.broadcast %38 : f32 to vector<1x20xf32>
    %40 = arith.addf %37, %39 : vector<1x20xf32>
    %c1_21 = arith.constant 1 : index
    %c2_22 = arith.constant 2 : index
    %41 = memref.load %arg2[%c1_21, %c2_22] : memref<3x10xf32, #tpu.memory_space<smem>>
    %42 = vector.broadcast %41 : f32 to vector<1x20xf32>
    %43 = arith.mulf %1, %42 : vector<1x20xf32>
    %44 = arith.addf %40, %43 : vector<1x20xf32>
    %c2_23 = arith.constant 2 : index
    %c2_24 = arith.constant 2 : index
    %45 = memref.load %arg2[%c2_23, %c2_24] : memref<3x10xf32, #tpu.memory_space<smem>>
    %46 = vector.broadcast %45 : f32 to vector<1x20xf32>
    %47 = arith.mulf %2, %46 : vector<1x20xf32>
    %48 = arith.addf %44, %47 : vector<1x20xf32>
    %cst_25 = arith.constant 0.000000e+00 : f32
    %49 = vector.broadcast %cst_25 : f32 to vector<1x20xf32>
    %50 = arith.maximumf %48, %49 : vector<1x20xf32>
    %c0_26 = arith.constant 0 : index
    %c3 = arith.constant 3 : index
    %51 = memref.load %arg2[%c0_26, %c3] : memref<3x10xf32, #tpu.memory_space<smem>>
    %52 = vector.broadcast %51 : f32 to vector<1x20xf32>
    %53 = arith.mulf %0, %52 : vector<1x20xf32>
    %c3_27 = arith.constant 3 : index
    %54 = memref.load %arg3[%c3_27] : memref<10xf32, #tpu.memory_space<smem>>
    %55 = vector.broadcast %54 : f32 to vector<1x20xf32>
    %56 = arith.addf %53, %55 : vector<1x20xf32>
    %c1_28 = arith.constant 1 : index
    %c3_29 = arith.constant 3 : index
    %57 = memref.load %arg2[%c1_28, %c3_29] : memref<3x10xf32, #tpu.memory_space<smem>>
    %58 = vector.broadcast %57 : f32 to vector<1x20xf32>
    %59 = arith.mulf %1, %58 : vector<1x20xf32>
    %60 = arith.addf %56, %59 : vector<1x20xf32>
    %c2_30 = arith.constant 2 : index
    %c3_31 = arith.constant 3 : index
    %61 = memref.load %arg2[%c2_30, %c3_31] : memref<3x10xf32, #tpu.memory_space<smem>>
    %62 = vector.broadcast %61 : f32 to vector<1x20xf32>
    %63 = arith.mulf %2, %62 : vector<1x20xf32>
    %64 = arith.addf %60, %63 : vector<1x20xf32>
    %cst_32 = arith.constant 0.000000e+00 : f32
    %65 = vector.broadcast %cst_32 : f32 to vector<1x20xf32>
    %66 = arith.maximumf %64, %65 : vector<1x20xf32>
    %c0_33 = arith.constant 0 : index
    %c4 = arith.constant 4 : index
    %67 = memref.load %arg2[%c0_33, %c4] : memref<3x10xf32, #tpu.memory_space<smem>>
    %68 = vector.broadcast %67 : f32 to vector<1x20xf32>
    %69 = arith.mulf %0, %68 : vector<1x20xf32>
    %c4_34 = arith.constant 4 : index
    %70 = memref.load %arg3[%c4_34] : memref<10xf32, #tpu.memory_space<smem>>
    %71 = vector.broadcast %70 : f32 to vector<1x20xf32>
    %72 = arith.addf %69, %71 : vector<1x20xf32>
    %c1_35 = arith.constant 1 : index
    %c4_36 = arith.constant 4 : index
    %73 = memref.load %arg2[%c1_35, %c4_36] : memref<3x10xf32, #tpu.memory_space<smem>>
    %74 = vector.broadcast %73 : f32 to vector<1x20xf32>
    %75 = arith.mulf %1, %74 : vector<1x20xf32>
    %76 = arith.addf %72, %75 : vector<1x20xf32>
    %c2_37 = arith.constant 2 : index
    %c4_38 = arith.constant 4 : index
    %77 = memref.load %arg2[%c2_37, %c4_38] : memref<3x10xf32, #tpu.memory_space<smem>>
    %78 = vector.broadcast %77 : f32 to vector<1x20xf32>
    %79 = arith.mulf %2, %78 : vector<1x20xf32>
    %80 = arith.addf %76, %79 : vector<1x20xf32>
    %cst_39 = arith.constant 0.000000e+00 : f32
    %81 = vector.broadcast %cst_39 : f32 to vector<1x20xf32>
    %82 = arith.maximumf %80, %81 : vector<1x20xf32>
    %c0_40 = arith.constant 0 : index
    %c5 = arith.constant 5 : index
    %83 = memref.load %arg2[%c0_40, %c5] : memref<3x10xf32, #tpu.memory_space<smem>>
    %84 = vector.broadcast %83 : f32 to vector<1x20xf32>
    %85 = arith.mulf %0, %84 : vector<1x20xf32>
    %c5_41 = arith.constant 5 : index
    %86 = memref.load %arg3[%c5_41] : memref<10xf32, #tpu.memory_space<smem>>
    %87 = vector.broadcast %86 : f32 to vector<1x20xf32>
    %88 = arith.addf %85, %87 : vector<1x20xf32>
    %c1_42 = arith.constant 1 : index
    %c5_43 = arith.constant 5 : index
    %89 = memref.load %arg2[%c1_42, %c5_43] : memref<3x10xf32, #tpu.memory_space<smem>>
    %90 = vector.broadcast %89 : f32 to vector<1x20xf32>
    %91 = arith.mulf %1, %90 : vector<1x20xf32>
    %92 = arith.addf %88, %91 : vector<1x20xf32>
    %c2_44 = arith.constant 2 : index
    %c5_45 = arith.constant 5 : index
    %93 = memref.load %arg2[%c2_44, %c5_45] : memref<3x10xf32, #tpu.memory_space<smem>>
    %94 = vector.broadcast %93 : f32 to vector<1x20xf32>
    %95 = arith.mulf %2, %94 : vector<1x20xf32>
    %96 = arith.addf %92, %95 : vector<1x20xf32>
    %cst_46 = arith.constant 0.000000e+00 : f32
    %97 = vector.broadcast %cst_46 : f32 to vector<1x20xf32>
    %98 = arith.maximumf %96, %97 : vector<1x20xf32>
    %c0_47 = arith.constant 0 : index
    %c6 = arith.constant 6 : index
    %99 = memref.load %arg2[%c0_47, %c6] : memref<3x10xf32, #tpu.memory_space<smem>>
    %100 = vector.broadcast %99 : f32 to vector<1x20xf32>
    %101 = arith.mulf %0, %100 : vector<1x20xf32>
    %c6_48 = arith.constant 6 : index
    %102 = memref.load %arg3[%c6_48] : memref<10xf32, #tpu.memory_space<smem>>
    %103 = vector.broadcast %102 : f32 to vector<1x20xf32>
    %104 = arith.addf %101, %103 : vector<1x20xf32>
    %c1_49 = arith.constant 1 : index
    %c6_50 = arith.constant 6 : index
    %105 = memref.load %arg2[%c1_49, %c6_50] : memref<3x10xf32, #tpu.memory_space<smem>>
    %106 = vector.broadcast %105 : f32 to vector<1x20xf32>
    %107 = arith.mulf %1, %106 : vector<1x20xf32>
    %108 = arith.addf %104, %107 : vector<1x20xf32>
    %c2_51 = arith.constant 2 : index
    %c6_52 = arith.constant 6 : index
    %109 = memref.load %arg2[%c2_51, %c6_52] : memref<3x10xf32, #tpu.memory_space<smem>>
    %110 = vector.broadcast %109 : f32 to vector<1x20xf32>
    %111 = arith.mulf %2, %110 : vector<1x20xf32>
    %112 = arith.addf %108, %111 : vector<1x20xf32>
    %cst_53 = arith.constant 0.000000e+00 : f32
    %113 = vector.broadcast %cst_53 : f32 to vector<1x20xf32>
    %114 = arith.maximumf %112, %113 : vector<1x20xf32>
    %c0_54 = arith.constant 0 : index
    %c7 = arith.constant 7 : index
    %115 = memref.load %arg2[%c0_54, %c7] : memref<3x10xf32, #tpu.memory_space<smem>>
    %116 = vector.broadcast %115 : f32 to vector<1x20xf32>
    %117 = arith.mulf %0, %116 : vector<1x20xf32>
    %c7_55 = arith.constant 7 : index
    %118 = memref.load %arg3[%c7_55] : memref<10xf32, #tpu.memory_space<smem>>
    %119 = vector.broadcast %118 : f32 to vector<1x20xf32>
    %120 = arith.addf %117, %119 : vector<1x20xf32>
    %c1_56 = arith.constant 1 : index
    %c7_57 = arith.constant 7 : index
    %121 = memref.load %arg2[%c1_56, %c7_57] : memref<3x10xf32, #tpu.memory_space<smem>>
    %122 = vector.broadcast %121 : f32 to vector<1x20xf32>
    %123 = arith.mulf %1, %122 : vector<1x20xf32>
    %124 = arith.addf %120, %123 : vector<1x20xf32>
    %c2_58 = arith.constant 2 : index
    %c7_59 = arith.constant 7 : index
    %125 = memref.load %arg2[%c2_58, %c7_59] : memref<3x10xf32, #tpu.memory_space<smem>>
    %126 = vector.broadcast %125 : f32 to vector<1x20xf32>
    %127 = arith.mulf %2, %126 : vector<1x20xf32>
    %128 = arith.addf %124, %127 : vector<1x20xf32>
    %cst_60 = arith.constant 0.000000e+00 : f32
    %129 = vector.broadcast %cst_60 : f32 to vector<1x20xf32>
    %130 = arith.maximumf %128, %129 : vector<1x20xf32>
    %c0_61 = arith.constant 0 : index
    %c8 = arith.constant 8 : index
    %131 = memref.load %arg2[%c0_61, %c8] : memref<3x10xf32, #tpu.memory_space<smem>>
    %132 = vector.broadcast %131 : f32 to vector<1x20xf32>
    %133 = arith.mulf %0, %132 : vector<1x20xf32>
    %c8_62 = arith.constant 8 : index
    %134 = memref.load %arg3[%c8_62] : memref<10xf32, #tpu.memory_space<smem>>
    %135 = vector.broadcast %134 : f32 to vector<1x20xf32>
    %136 = arith.addf %133, %135 : vector<1x20xf32>
    %c1_63 = arith.constant 1 : index
    %c8_64 = arith.constant 8 : index
    %137 = memref.load %arg2[%c1_63, %c8_64] : memref<3x10xf32, #tpu.memory_space<smem>>
    %138 = vector.broadcast %137 : f32 to vector<1x20xf32>
    %139 = arith.mulf %1, %138 : vector<1x20xf32>
    %140 = arith.addf %136, %139 : vector<1x20xf32>
    %c2_65 = arith.constant 2 : index
    %c8_66 = arith.constant 8 : index
    %141 = memref.load %arg2[%c2_65, %c8_66] : memref<3x10xf32, #tpu.memory_space<smem>>
    %142 = vector.broadcast %141 : f32 to vector<1x20xf32>
    %143 = arith.mulf %2, %142 : vector<1x20xf32>
    %144 = arith.addf %140, %143 : vector<1x20xf32>
    %cst_67 = arith.constant 0.000000e+00 : f32
    %145 = vector.broadcast %cst_67 : f32 to vector<1x20xf32>
    %146 = arith.maximumf %144, %145 : vector<1x20xf32>
    %c0_68 = arith.constant 0 : index
    %c9 = arith.constant 9 : index
    %147 = memref.load %arg2[%c0_68, %c9] : memref<3x10xf32, #tpu.memory_space<smem>>
    %148 = vector.broadcast %147 : f32 to vector<1x20xf32>
    %149 = arith.mulf %0, %148 : vector<1x20xf32>
    %c9_69 = arith.constant 9 : index
    %150 = memref.load %arg3[%c9_69] : memref<10xf32, #tpu.memory_space<smem>>
    %151 = vector.broadcast %150 : f32 to vector<1x20xf32>
    %152 = arith.addf %149, %151 : vector<1x20xf32>
    %c1_70 = arith.constant 1 : index
    %c9_71 = arith.constant 9 : index
    %153 = memref.load %arg2[%c1_70, %c9_71] : memref<3x10xf32, #tpu.memory_space<smem>>
    %154 = vector.broadcast %153 : f32 to vector<1x20xf32>
    %155 = arith.mulf %1, %154 : vector<1x20xf32>
    %156 = arith.addf %152, %155 : vector<1x20xf32>
    %c2_72 = arith.constant 2 : index
    %c9_73 = arith.constant 9 : index
    %157 = memref.load %arg2[%c2_72, %c9_73] : memref<3x10xf32, #tpu.memory_space<smem>>
    %158 = vector.broadcast %157 : f32 to vector<1x20xf32>
    %159 = arith.mulf %2, %158 : vector<1x20xf32>
    %160 = arith.addf %156, %159 : vector<1x20xf32>
    %cst_74 = arith.constant 0.000000e+00 : f32
    %161 = vector.broadcast %cst_74 : f32 to vector<1x20xf32>
    %162 = arith.maximumf %160, %161 : vector<1x20xf32>
    %c0_75 = arith.constant 0 : index
    %c0_76 = arith.constant 0 : index
    %163 = memref.load %arg4[%c0_75, %c0_76] : memref<10x6xf32, #tpu.memory_space<smem>>
    %164 = vector.broadcast %163 : f32 to vector<1x20xf32>
    %165 = arith.mulf %18, %164 : vector<1x20xf32>
    %c0_77 = arith.constant 0 : index
    %166 = memref.load %arg5[%c0_77] : memref<6xf32, #tpu.memory_space<smem>>
    %167 = vector.broadcast %166 : f32 to vector<1x20xf32>
    %168 = arith.addf %165, %167 : vector<1x20xf32>
    %c1_78 = arith.constant 1 : index
    %c0_79 = arith.constant 0 : index
    %169 = memref.load %arg4[%c1_78, %c0_79] : memref<10x6xf32, #tpu.memory_space<smem>>
    %170 = vector.broadcast %169 : f32 to vector<1x20xf32>
    %171 = arith.mulf %34, %170 : vector<1x20xf32>
    %172 = arith.addf %168, %171 : vector<1x20xf32>
    %c2_80 = arith.constant 2 : index
    %c0_81 = arith.constant 0 : index
    %173 = memref.load %arg4[%c2_80, %c0_81] : memref<10x6xf32, #tpu.memory_space<smem>>
    %174 = vector.broadcast %173 : f32 to vector<1x20xf32>
    %175 = arith.mulf %50, %174 : vector<1x20xf32>
    %176 = arith.addf %172, %175 : vector<1x20xf32>
    %c3_82 = arith.constant 3 : index
    %c0_83 = arith.constant 0 : index
    %177 = memref.load %arg4[%c3_82, %c0_83] : memref<10x6xf32, #tpu.memory_space<smem>>
    %178 = vector.broadcast %177 : f32 to vector<1x20xf32>
    %179 = arith.mulf %66, %178 : vector<1x20xf32>
    %180 = arith.addf %176, %179 : vector<1x20xf32>
    %c4_84 = arith.constant 4 : index
    %c0_85 = arith.constant 0 : index
    %181 = memref.load %arg4[%c4_84, %c0_85] : memref<10x6xf32, #tpu.memory_space<smem>>
    %182 = vector.broadcast %181 : f32 to vector<1x20xf32>
    %183 = arith.mulf %82, %182 : vector<1x20xf32>
    %184 = arith.addf %180, %183 : vector<1x20xf32>
    %c5_86 = arith.constant 5 : index
    %c0_87 = arith.constant 0 : index
    %185 = memref.load %arg4[%c5_86, %c0_87] : memref<10x6xf32, #tpu.memory_space<smem>>
    %186 = vector.broadcast %185 : f32 to vector<1x20xf32>
    %187 = arith.mulf %98, %186 : vector<1x20xf32>
    %188 = arith.addf %184, %187 : vector<1x20xf32>
    %c6_88 = arith.constant 6 : index
    %c0_89 = arith.constant 0 : index
    %189 = memref.load %arg4[%c6_88, %c0_89] : memref<10x6xf32, #tpu.memory_space<smem>>
    %190 = vector.broadcast %189 : f32 to vector<1x20xf32>
    %191 = arith.mulf %114, %190 : vector<1x20xf32>
    %192 = arith.addf %188, %191 : vector<1x20xf32>
    %c7_90 = arith.constant 7 : index
    %c0_91 = arith.constant 0 : index
    %193 = memref.load %arg4[%c7_90, %c0_91] : memref<10x6xf32, #tpu.memory_space<smem>>
    %194 = vector.broadcast %193 : f32 to vector<1x20xf32>
    %195 = arith.mulf %130, %194 : vector<1x20xf32>
    %196 = arith.addf %192, %195 : vector<1x20xf32>
    %c8_92 = arith.constant 8 : index
    %c0_93 = arith.constant 0 : index
    %197 = memref.load %arg4[%c8_92, %c0_93] : memref<10x6xf32, #tpu.memory_space<smem>>
    %198 = vector.broadcast %197 : f32 to vector<1x20xf32>
    %199 = arith.mulf %146, %198 : vector<1x20xf32>
    %200 = arith.addf %196, %199 : vector<1x20xf32>
    %c9_94 = arith.constant 9 : index
    %c0_95 = arith.constant 0 : index
    %201 = memref.load %arg4[%c9_94, %c0_95] : memref<10x6xf32, #tpu.memory_space<smem>>
    %202 = vector.broadcast %201 : f32 to vector<1x20xf32>
    %203 = arith.mulf %162, %202 : vector<1x20xf32>
    %204 = arith.addf %200, %203 : vector<1x20xf32>
    %c0_96 = arith.constant 0 : index
    %c0_97 = arith.constant 0 : index
    %205 = vector.load %arg6[%c0_96, %c0_97] : memref<6x20xf32, #tpu.memory_space<vmem>>, vector<1x20xf32>
    tpu.vector_store %arg6[%c0_96, %c0_97], %204 {strides = array<i32>} : memref<6x20xf32, #tpu.memory_space<vmem>>, vector<1x20xf32>,
    %c0_98 = arith.constant 0 : index
    %c1_99 = arith.constant 1 : index
    %206 = memref.load %arg4[%c0_98, %c1_99] : memref<10x6xf32, #tpu.memory_space<smem>>
    %207 = vector.broadcast %206 : f32 to vector<1x20xf32>
    %208 = arith.mulf %18, %207 : vector<1x20xf32>
    %c1_100 = arith.constant 1 : index
    %209 = memref.load %arg5[%c1_100] : memref<6xf32, #tpu.memory_space<smem>>
    %210 = vector.broadcast %209 : f32 to vector<1x20xf32>
    %211 = arith.addf %208, %210 : vector<1x20xf32>
    %c1_101 = arith.constant 1 : index
    %c1_102 = arith.constant 1 : index
    %212 = memref.load %arg4[%c1_101, %c1_102] : memref<10x6xf32, #tpu.memory_space<smem>>
    %213 = vector.broadcast %212 : f32 to vector<1x20xf32>
    %214 = arith.mulf %34, %213 : vector<1x20xf32>
    %215 = arith.addf %211, %214 : vector<1x20xf32>
    %c2_103 = arith.constant 2 : index
    %c1_104 = arith.constant 1 : index
    %216 = memref.load %arg4[%c2_103, %c1_104] : memref<10x6xf32, #tpu.memory_space<smem>>
    %217 = vector.broadcast %216 : f32 to vector<1x20xf32>
    %218 = arith.mulf %50, %217 : vector<1x20xf32>
    %219 = arith.addf %215, %218 : vector<1x20xf32>
    %c3_105 = arith.constant 3 : index
    %c1_106 = arith.constant 1 : index
    %220 = memref.load %arg4[%c3_105, %c1_106] : memref<10x6xf32, #tpu.memory_space<smem>>
    %221 = vector.broadcast %220 : f32 to vector<1x20xf32>
    %222 = arith.mulf %66, %221 : vector<1x20xf32>
    %223 = arith.addf %219, %222 : vector<1x20xf32>
    %c4_107 = arith.constant 4 : index
    %c1_108 = arith.constant 1 : index
    %224 = memref.load %arg4[%c4_107, %c1_108] : memref<10x6xf32, #tpu.memory_space<smem>>
    %225 = vector.broadcast %224 : f32 to vector<1x20xf32>
    %226 = arith.mulf %82, %225 : vector<1x20xf32>
    %227 = arith.addf %223, %226 : vector<1x20xf32>
    %c5_109 = arith.constant 5 : index
    %c1_110 = arith.constant 1 : index
    %228 = memref.load %arg4[%c5_109, %c1_110] : memref<10x6xf32, #tpu.memory_space<smem>>
    %229 = vector.broadcast %228 : f32 to vector<1x20xf32>
    %230 = arith.mulf %98, %229 : vector<1x20xf32>
    %231 = arith.addf %227, %230 : vector<1x20xf32>
    %c6_111 = arith.constant 6 : index
    %c1_112 = arith.constant 1 : index
    %232 = memref.load %arg4[%c6_111, %c1_112] : memref<10x6xf32, #tpu.memory_space<smem>>
    %233 = vector.broadcast %232 : f32 to vector<1x20xf32>
    %234 = arith.mulf %114, %233 : vector<1x20xf32>
    %235 = arith.addf %231, %234 : vector<1x20xf32>
    %c7_113 = arith.constant 7 : index
    %c1_114 = arith.constant 1 : index
    %236 = memref.load %arg4[%c7_113, %c1_114] : memref<10x6xf32, #tpu.memory_space<smem>>
    %237 = vector.broadcast %236 : f32 to vector<1x20xf32>
    %238 = arith.mulf %130, %237 : vector<1x20xf32>
    %239 = arith.addf %235, %238 : vector<1x20xf32>
    %c8_115 = arith.constant 8 : index
    %c1_116 = arith.constant 1 : index
    %240 = memref.load %arg4[%c8_115, %c1_116] : memref<10x6xf32, #tpu.memory_space<smem>>
    %241 = vector.broadcast %240 : f32 to vector<1x20xf32>
    %242 = arith.mulf %146, %241 : vector<1x20xf32>
    %243 = arith.addf %239, %242 : vector<1x20xf32>
    %c9_117 = arith.constant 9 : index
    %c1_118 = arith.constant 1 : index
    %244 = memref.load %arg4[%c9_117, %c1_118] : memref<10x6xf32, #tpu.memory_space<smem>>
    %245 = vector.broadcast %244 : f32 to vector<1x20xf32>
    %246 = arith.mulf %162, %245 : vector<1x20xf32>
    %247 = arith.addf %243, %246 : vector<1x20xf32>
    %c1_119 = arith.constant 1 : index
    %c0_120 = arith.constant 0 : index
    %248 = vector.load %arg6[%c1_119, %c0_120] : memref<6x20xf32, #tpu.memory_space<vmem>>, vector<1x20xf32>
    tpu.vector_store %arg6[%c1_119, %c0_120], %247 {strides = array<i32>} : memref<6x20xf32, #tpu.memory_space<vmem>>, vector<1x20xf32>,
    %c0_121 = arith.constant 0 : index
    %c2_122 = arith.constant 2 : index
    %249 = memref.load %arg4[%c0_121, %c2_122] : memref<10x6xf32, #tpu.memory_space<smem>>
    %250 = vector.broadcast %249 : f32 to vector<1x20xf32>
    %251 = arith.mulf %18, %250 : vector<1x20xf32>
    %c2_123 = arith.constant 2 : index
    %252 = memref.load %arg5[%c2_123] : memref<6xf32, #tpu.memory_space<smem>>
    %253 = vector.broadcast %252 : f32 to vector<1x20xf32>
    %254 = arith.addf %251, %253 : vector<1x20xf32>
    %c1_124 = arith.constant 1 : index
    %c2_125 = arith.constant 2 : index
    %255 = memref.load %arg4[%c1_124, %c2_125] : memref<10x6xf32, #tpu.memory_space<smem>>
    %256 = vector.broadcast %255 : f32 to vector<1x20xf32>
    %257 = arith.mulf %34, %256 : vector<1x20xf32>
    %258 = arith.addf %254, %257 : vector<1x20xf32>
    %c2_126 = arith.constant 2 : index
    %c2_127 = arith.constant 2 : index
    %259 = memref.load %arg4[%c2_126, %c2_127] : memref<10x6xf32, #tpu.memory_space<smem>>
    %260 = vector.broadcast %259 : f32 to vector<1x20xf32>
    %261 = arith.mulf %50, %260 : vector<1x20xf32>
    %262 = arith.addf %258, %261 : vector<1x20xf32>
    %c3_128 = arith.constant 3 : index
    %c2_129 = arith.constant 2 : index
    %263 = memref.load %arg4[%c3_128, %c2_129] : memref<10x6xf32, #tpu.memory_space<smem>>
    %264 = vector.broadcast %263 : f32 to vector<1x20xf32>
    %265 = arith.mulf %66, %264 : vector<1x20xf32>
    %266 = arith.addf %262, %265 : vector<1x20xf32>
    %c4_130 = arith.constant 4 : index
    %c2_131 = arith.constant 2 : index
    %267 = memref.load %arg4[%c4_130, %c2_131] : memref<10x6xf32, #tpu.memory_space<smem>>
    %268 = vector.broadcast %267 : f32 to vector<1x20xf32>
    %269 = arith.mulf %82, %268 : vector<1x20xf32>
    %270 = arith.addf %266, %269 : vector<1x20xf32>
    %c5_132 = arith.constant 5 : index
    %c2_133 = arith.constant 2 : index
    %271 = memref.load %arg4[%c5_132, %c2_133] : memref<10x6xf32, #tpu.memory_space<smem>>
    %272 = vector.broadcast %271 : f32 to vector<1x20xf32>
    %273 = arith.mulf %98, %272 : vector<1x20xf32>
    %274 = arith.addf %270, %273 : vector<1x20xf32>
    %c6_134 = arith.constant 6 : index
    %c2_135 = arith.constant 2 : index
    %275 = memref.load %arg4[%c6_134, %c2_135] : memref<10x6xf32, #tpu.memory_space<smem>>
    %276 = vector.broadcast %275 : f32 to vector<1x20xf32>
    %277 = arith.mulf %114, %276 : vector<1x20xf32>
    %278 = arith.addf %274, %277 : vector<1x20xf32>
    %c7_136 = arith.constant 7 : index
    %c2_137 = arith.constant 2 : index
    %279 = memref.load %arg4[%c7_136, %c2_137] : memref<10x6xf32, #tpu.memory_space<smem>>
    %280 = vector.broadcast %279 : f32 to vector<1x20xf32>
    %281 = arith.mulf %130, %280 : vector<1x20xf32>
    %282 = arith.addf %278, %281 : vector<1x20xf32>
    %c8_138 = arith.constant 8 : index
    %c2_139 = arith.constant 2 : index
    %283 = memref.load %arg4[%c8_138, %c2_139] : memref<10x6xf32, #tpu.memory_space<smem>>
    %284 = vector.broadcast %283 : f32 to vector<1x20xf32>
    %285 = arith.mulf %146, %284 : vector<1x20xf32>
    %286 = arith.addf %282, %285 : vector<1x20xf32>
    %c9_140 = arith.constant 9 : index
    %c2_141 = arith.constant 2 : index
    %287 = memref.load %arg4[%c9_140, %c2_141] : memref<10x6xf32, #tpu.memory_space<smem>>
    %288 = vector.broadcast %287 : f32 to vector<1x20xf32>
    %289 = arith.mulf %162, %288 : vector<1x20xf32>
    %290 = arith.addf %286, %289 : vector<1x20xf32>
    %c2_142 = arith.constant 2 : index
    %c0_143 = arith.constant 0 : index
    %291 = vector.load %arg6[%c2_142, %c0_143] : memref<6x20xf32, #tpu.memory_space<vmem>>, vector<1x20xf32>
    tpu.vector_store %arg6[%c2_142, %c0_143], %290 {strides = array<i32>} : memref<6x20xf32, #tpu.memory_space<vmem>>, vector<1x20xf32>,
    %c0_144 = arith.constant 0 : index
    %c3_145 = arith.constant 3 : index
    %292 = memref.load %arg4[%c0_144, %c3_145] : memref<10x6xf32, #tpu.memory_space<smem>>
    %293 = vector.broadcast %292 : f32 to vector<1x20xf32>
    %294 = arith.mulf %18, %293 : vector<1x20xf32>
    %c3_146 = arith.constant 3 : index
    %295 = memref.load %arg5[%c3_146] : memref<6xf32, #tpu.memory_space<smem>>
    %296 = vector.broadcast %295 : f32 to vector<1x20xf32>
    %297 = arith.addf %294, %296 : vector<1x20xf32>
    %c1_147 = arith.constant 1 : index
    %c3_148 = arith.constant 3 : index
    %298 = memref.load %arg4[%c1_147, %c3_148] : memref<10x6xf32, #tpu.memory_space<smem>>
    %299 = vector.broadcast %298 : f32 to vector<1x20xf32>
    %300 = arith.mulf %34, %299 : vector<1x20xf32>
    %301 = arith.addf %297, %300 : vector<1x20xf32>
    %c2_149 = arith.constant 2 : index
    %c3_150 = arith.constant 3 : index
    %302 = memref.load %arg4[%c2_149, %c3_150] : memref<10x6xf32, #tpu.memory_space<smem>>
    %303 = vector.broadcast %302 : f32 to vector<1x20xf32>
    %304 = arith.mulf %50, %303 : vector<1x20xf32>
    %305 = arith.addf %301, %304 : vector<1x20xf32>
    %c3_151 = arith.constant 3 : index
    %c3_152 = arith.constant 3 : index
    %306 = memref.load %arg4[%c3_151, %c3_152] : memref<10x6xf32, #tpu.memory_space<smem>>
    %307 = vector.broadcast %306 : f32 to vector<1x20xf32>
    %308 = arith.mulf %66, %307 : vector<1x20xf32>
    %309 = arith.addf %305, %308 : vector<1x20xf32>
    %c4_153 = arith.constant 4 : index
    %c3_154 = arith.constant 3 : index
    %310 = memref.load %arg4[%c4_153, %c3_154] : memref<10x6xf32, #tpu.memory_space<smem>>
    %311 = vector.broadcast %310 : f32 to vector<1x20xf32>
    %312 = arith.mulf %82, %311 : vector<1x20xf32>
    %313 = arith.addf %309, %312 : vector<1x20xf32>
    %c5_155 = arith.constant 5 : index
    %c3_156 = arith.constant 3 : index
    %314 = memref.load %arg4[%c5_155, %c3_156] : memref<10x6xf32, #tpu.memory_space<smem>>
    %315 = vector.broadcast %314 : f32 to vector<1x20xf32>
    %316 = arith.mulf %98, %315 : vector<1x20xf32>
    %317 = arith.addf %313, %316 : vector<1x20xf32>
    %c6_157 = arith.constant 6 : index
    %c3_158 = arith.constant 3 : index
    %318 = memref.load %arg4[%c6_157, %c3_158] : memref<10x6xf32, #tpu.memory_space<smem>>
    %319 = vector.broadcast %318 : f32 to vector<1x20xf32>
    %320 = arith.mulf %114, %319 : vector<1x20xf32>
    %321 = arith.addf %317, %320 : vector<1x20xf32>
    %c7_159 = arith.constant 7 : index
    %c3_160 = arith.constant 3 : index
    %322 = memref.load %arg4[%c7_159, %c3_160] : memref<10x6xf32, #tpu.memory_space<smem>>
    %323 = vector.broadcast %322 : f32 to vector<1x20xf32>
    %324 = arith.mulf %130, %323 : vector<1x20xf32>
    %325 = arith.addf %321, %324 : vector<1x20xf32>
    %c8_161 = arith.constant 8 : index
    %c3_162 = arith.constant 3 : index
    %326 = memref.load %arg4[%c8_161, %c3_162] : memref<10x6xf32, #tpu.memory_space<smem>>
    %327 = vector.broadcast %326 : f32 to vector<1x20xf32>
    %328 = arith.mulf %146, %327 : vector<1x20xf32>
    %329 = arith.addf %325, %328 : vector<1x20xf32>
    %c9_163 = arith.constant 9 : index
    %c3_164 = arith.constant 3 : index
    %330 = memref.load %arg4[%c9_163, %c3_164] : memref<10x6xf32, #tpu.memory_space<smem>>
    %331 = vector.broadcast %330 : f32 to vector<1x20xf32>
    %332 = arith.mulf %162, %331 : vector<1x20xf32>
    %333 = arith.addf %329, %332 : vector<1x20xf32>
    %c3_165 = arith.constant 3 : index
    %c0_166 = arith.constant 0 : index
    %334 = vector.load %arg6[%c3_165, %c0_166] : memref<6x20xf32, #tpu.memory_space<vmem>>, vector<1x20xf32>
    tpu.vector_store %arg6[%c3_165, %c0_166], %333 {strides = array<i32>} : memref<6x20xf32, #tpu.memory_space<vmem>>, vector<1x20xf32>,
    %c0_167 = arith.constant 0 : index
    %c4_168 = arith.constant 4 : index
    %335 = memref.load %arg4[%c0_167, %c4_168] : memref<10x6xf32, #tpu.memory_space<smem>>
    %336 = vector.broadcast %335 : f32 to vector<1x20xf32>
    %337 = arith.mulf %18, %336 : vector<1x20xf32>
    %c4_169 = arith.constant 4 : index
    %338 = memref.load %arg5[%c4_169] : memref<6xf32, #tpu.memory_space<smem>>
    %339 = vector.broadcast %338 : f32 to vector<1x20xf32>
    %340 = arith.addf %337, %339 : vector<1x20xf32>
    %c1_170 = arith.constant 1 : index
    %c4_171 = arith.constant 4 : index
    %341 = memref.load %arg4[%c1_170, %c4_171] : memref<10x6xf32, #tpu.memory_space<smem>>
    %342 = vector.broadcast %341 : f32 to vector<1x20xf32>
    %343 = arith.mulf %34, %342 : vector<1x20xf32>
    %344 = arith.addf %340, %343 : vector<1x20xf32>
    %c2_172 = arith.constant 2 : index
    %c4_173 = arith.constant 4 : index
    %345 = memref.load %arg4[%c2_172, %c4_173] : memref<10x6xf32, #tpu.memory_space<smem>>
    %346 = vector.broadcast %345 : f32 to vector<1x20xf32>
    %347 = arith.mulf %50, %346 : vector<1x20xf32>
    %348 = arith.addf %344, %347 : vector<1x20xf32>
    %c3_174 = arith.constant 3 : index
    %c4_175 = arith.constant 4 : index
    %349 = memref.load %arg4[%c3_174, %c4_175] : memref<10x6xf32, #tpu.memory_space<smem>>
    %350 = vector.broadcast %349 : f32 to vector<1x20xf32>
    %351 = arith.mulf %66, %350 : vector<1x20xf32>
    %352 = arith.addf %348, %351 : vector<1x20xf32>
    %c4_176 = arith.constant 4 : index
    %c4_177 = arith.constant 4 : index
    %353 = memref.load %arg4[%c4_176, %c4_177] : memref<10x6xf32, #tpu.memory_space<smem>>
    %354 = vector.broadcast %353 : f32 to vector<1x20xf32>
    %355 = arith.mulf %82, %354 : vector<1x20xf32>
    %356 = arith.addf %352, %355 : vector<1x20xf32>
    %c5_178 = arith.constant 5 : index
    %c4_179 = arith.constant 4 : index
    %357 = memref.load %arg4[%c5_178, %c4_179] : memref<10x6xf32, #tpu.memory_space<smem>>
    %358 = vector.broadcast %357 : f32 to vector<1x20xf32>
    %359 = arith.mulf %98, %358 : vector<1x20xf32>
    %360 = arith.addf %356, %359 : vector<1x20xf32>
    %c6_180 = arith.constant 6 : index
    %c4_181 = arith.constant 4 : index
    %361 = memref.load %arg4[%c6_180, %c4_181] : memref<10x6xf32, #tpu.memory_space<smem>>
    %362 = vector.broadcast %361 : f32 to vector<1x20xf32>
    %363 = arith.mulf %114, %362 : vector<1x20xf32>
    %364 = arith.addf %360, %363 : vector<1x20xf32>
    %c7_182 = arith.constant 7 : index
    %c4_183 = arith.constant 4 : index
    %365 = memref.load %arg4[%c7_182, %c4_183] : memref<10x6xf32, #tpu.memory_space<smem>>
    %366 = vector.broadcast %365 : f32 to vector<1x20xf32>
    %367 = arith.mulf %130, %366 : vector<1x20xf32>
    %368 = arith.addf %364, %367 : vector<1x20xf32>
    %c8_184 = arith.constant 8 : index
    %c4_185 = arith.constant 4 : index
    %369 = memref.load %arg4[%c8_184, %c4_185] : memref<10x6xf32, #tpu.memory_space<smem>>
    %370 = vector.broadcast %369 : f32 to vector<1x20xf32>
    %371 = arith.mulf %146, %370 : vector<1x20xf32>
    %372 = arith.addf %368, %371 : vector<1x20xf32>
    %c9_186 = arith.constant 9 : index
    %c4_187 = arith.constant 4 : index
    %373 = memref.load %arg4[%c9_186, %c4_187] : memref<10x6xf32, #tpu.memory_space<smem>>
    %374 = vector.broadcast %373 : f32 to vector<1x20xf32>
    %375 = arith.mulf %162, %374 : vector<1x20xf32>
    %376 = arith.addf %372, %375 : vector<1x20xf32>
    %c4_188 = arith.constant 4 : index
    %c0_189 = arith.constant 0 : index
    %377 = vector.load %arg6[%c4_188, %c0_189] : memref<6x20xf32, #tpu.memory_space<vmem>>, vector<1x20xf32>
    tpu.vector_store %arg6[%c4_188, %c0_189], %376 {strides = array<i32>} : memref<6x20xf32, #tpu.memory_space<vmem>>, vector<1x20xf32>,
    %c0_190 = arith.constant 0 : index
    %c5_191 = arith.constant 5 : index
    %378 = memref.load %arg4[%c0_190, %c5_191] : memref<10x6xf32, #tpu.memory_space<smem>>
    %379 = vector.broadcast %378 : f32 to vector<1x20xf32>
    %380 = arith.mulf %18, %379 : vector<1x20xf32>
    %c5_192 = arith.constant 5 : index
    %381 = memref.load %arg5[%c5_192] : memref<6xf32, #tpu.memory_space<smem>>
    %382 = vector.broadcast %381 : f32 to vector<1x20xf32>
    %383 = arith.addf %380, %382 : vector<1x20xf32>
    %c1_193 = arith.constant 1 : index
    %c5_194 = arith.constant 5 : index
    %384 = memref.load %arg4[%c1_193, %c5_194] : memref<10x6xf32, #tpu.memory_space<smem>>
    %385 = vector.broadcast %384 : f32 to vector<1x20xf32>
    %386 = arith.mulf %34, %385 : vector<1x20xf32>
    %387 = arith.addf %383, %386 : vector<1x20xf32>
    %c2_195 = arith.constant 2 : index
    %c5_196 = arith.constant 5 : index
    %388 = memref.load %arg4[%c2_195, %c5_196] : memref<10x6xf32, #tpu.memory_space<smem>>
    %389 = vector.broadcast %388 : f32 to vector<1x20xf32>
    %390 = arith.mulf %50, %389 : vector<1x20xf32>
    %391 = arith.addf %387, %390 : vector<1x20xf32>
    %c3_197 = arith.constant 3 : index
    %c5_198 = arith.constant 5 : index
    %392 = memref.load %arg4[%c3_197, %c5_198] : memref<10x6xf32, #tpu.memory_space<smem>>
    %393 = vector.broadcast %392 : f32 to vector<1x20xf32>
    %394 = arith.mulf %66, %393 : vector<1x20xf32>
    %395 = arith.addf %391, %394 : vector<1x20xf32>
    %c4_199 = arith.constant 4 : index
    %c5_200 = arith.constant 5 : index
    %396 = memref.load %arg4[%c4_199, %c5_200] : memref<10x6xf32, #tpu.memory_space<smem>>
    %397 = vector.broadcast %396 : f32 to vector<1x20xf32>
    %398 = arith.mulf %82, %397 : vector<1x20xf32>
    %399 = arith.addf %395, %398 : vector<1x20xf32>
    %c5_201 = arith.constant 5 : index
    %c5_202 = arith.constant 5 : index
    %400 = memref.load %arg4[%c5_201, %c5_202] : memref<10x6xf32, #tpu.memory_space<smem>>
    %401 = vector.broadcast %400 : f32 to vector<1x20xf32>
    %402 = arith.mulf %98, %401 : vector<1x20xf32>
    %403 = arith.addf %399, %402 : vector<1x20xf32>
    %c6_203 = arith.constant 6 : index
    %c5_204 = arith.constant 5 : index
    %404 = memref.load %arg4[%c6_203, %c5_204] : memref<10x6xf32, #tpu.memory_space<smem>>
    %405 = vector.broadcast %404 : f32 to vector<1x20xf32>
    %406 = arith.mulf %114, %405 : vector<1x20xf32>
    %407 = arith.addf %403, %406 : vector<1x20xf32>
    %c7_205 = arith.constant 7 : index
    %c5_206 = arith.constant 5 : index
    %408 = memref.load %arg4[%c7_205, %c5_206] : memref<10x6xf32, #tpu.memory_space<smem>>
    %409 = vector.broadcast %408 : f32 to vector<1x20xf32>
    %410 = arith.mulf %130, %409 : vector<1x20xf32>
    %411 = arith.addf %407, %410 : vector<1x20xf32>
    %c8_207 = arith.constant 8 : index
    %c5_208 = arith.constant 5 : index
    %412 = memref.load %arg4[%c8_207, %c5_208] : memref<10x6xf32, #tpu.memory_space<smem>>
    %413 = vector.broadcast %412 : f32 to vector<1x20xf32>
    %414 = arith.mulf %146, %413 : vector<1x20xf32>
    %415 = arith.addf %411, %414 : vector<1x20xf32>
    %c9_209 = arith.constant 9 : index
    %c5_210 = arith.constant 5 : index
    %416 = memref.load %arg4[%c9_209, %c5_210] : memref<10x6xf32, #tpu.memory_space<smem>>
    %417 = vector.broadcast %416 : f32 to vector<1x20xf32>
    %418 = arith.mulf %162, %417 : vector<1x20xf32>
    %419 = arith.addf %415, %418 : vector<1x20xf32>
    %c5_211 = arith.constant 5 : index
    %c0_212 = arith.constant 0 : index
    %420 = vector.load %arg6[%c5_211, %c0_212] : memref<6x20xf32, #tpu.memory_space<vmem>>, vector<1x20xf32>
    tpu.vector_store %arg6[%c5_211, %c0_212], %419 {strides = array<i32>} : memref<6x20xf32, #tpu.memory_space<vmem>>, vector<1x20xf32>,
    return
  }
  func.func @transform_0(%arg0: i32) -> (i32, i32) {
    %c0_i32 = arith.constant 0 : i32
    %c0_i32_0 = arith.constant 0 : i32
    return %c0_i32, %arg0 : i32, i32
  }
  func.func @transform_1(%arg0: i32) -> (i32, i32) {
    %c0_i32 = arith.constant 0 : i32
    %c0_i32_0 = arith.constant 0 : i32
    %c0_i32_1 = arith.constant 0 : i32
    return %c0_i32, %c0_i32_0 : i32, i32
  }
  func.func @transform_2(%arg0: i32) -> i32 {
    %c0_i32 = arith.constant 0 : i32
    %c0_i32_0 = arith.constant 0 : i32
    return %c0_i32 : i32
  }
  func.func @transform_3(%arg0: i32) -> (i32, i32) {
    %c0_i32 = arith.constant 0 : i32
    %c0_i32_0 = arith.constant 0 : i32
    %c0_i32_1 = arith.constant 0 : i32
    return %c0_i32, %c0_i32_0 : i32, i32
  }
  func.func @transform_4(%arg0: i32) -> i32 {
    %c0_i32 = arith.constant 0 : i32
    %c0_i32_0 = arith.constant 0 : i32
    return %c0_i32 : i32
  }
  func.func @transform_5(%arg0: i32) -> (i32, i32) {
    %c0_i32 = arith.constant 0 : i32
    %c0_i32_0 = arith.constant 0 : i32
    return %c0_i32, %arg0 : i32, i32
  }
}

</mosaic_0001>

<llo_original>
// kernel: tpu_custom_call.1
$region0: #{tpu_custom_call.1}
  #allocation0 [shape = 'u32[]', space=smem, size = 0x4, offset = 0x4, fixed_abs, tag = 'smem constant byte address 0x4 - core index']
  #allocation1 [shape = 'u32[72,128]{1,0:T(1,128)}', space=vmem, size = 0x9000, scoped, tag = 'internal scratch']
  %s0 = inlined_call_operand.vmem [shape: f32[3,20], index: 0, kind: input, shape index: {}]
  %s1 = inlined_call_operand.vmem [shape: f32[3,10], index: 1, kind: input, shape index: {}]
  %s2 = inlined_call_operand.vmem [shape: f32[10], index: 2, kind: input, shape index: {}]
  %s3 = inlined_call_operand.vmem [shape: f32[10,6], index: 3, kind: input, shape index: {}]
  %s4 = inlined_call_operand.vmem [shape: f32[6], index: 4, kind: input, shape index: {}]
  %s5 = inlined_call_operand.hbm [shape: f32[6,20], index: 5, kind: output, shape index: {}]
  %s6 = sld [smem:[#allocation0]]
  $region46: #{tpu_custom_call.1} parent=0
    _
  %s8 = ssub.s32 1, %s6
  %s9 = scalar_select 0, %s8, %s6
  $region1: #{tpu_custom_call.1} parent=0
    #allocation2 [shape = 'u8[2048]{0}', space=smem, size = 0x800, scoped, tag = 'input window, operand 1, single buffered']
    #allocation3 [shape = 's32[1]{0}', space=sflag, size = 0x4, scoped, tag = 'scoped memory for tpu_custom_call.1']
    #allocation4 [shape = 's32[1]{0}', space=sflag, size = 0x4, scoped, tag = 'scoped memory for tpu_custom_call.1']
    #allocation5 [shape = 'u8[512]{0}', space=smem, size = 0x200, scoped, tag = 'input window, operand 2, single buffered']
    #allocation6 [shape = 's32[1]{0}', space=sflag, size = 0x4, scoped, tag = 'scoped memory for tpu_custom_call.1']
    #allocation7 [shape = 'u8[8192]{0}', space=smem, size = 0x2000, scoped, tag = 'input window, operand 3, single buffered']
    #allocation8 [shape = 'u8[512]{0}', space=smem, size = 0x200, scoped, tag = 'input window, operand 4, single buffered']
    #allocation9 [shape = 's32[1]{0}', space=sflag, size = 0x4, scoped, tag = 'scoped memory for tpu_custom_call.1']
    #allocation10 [shape = 'u8[4096]{0}', space=vmem, size = 0x1000, scoped, tag = 'output window, operand 0, single buffered']
    %10 = vsyncpa [#allocation4], 0
    %11 = vsyncpa [#allocation6], 0
    %12 = vsyncpa [#allocation9], 0
    %13 = vsyncpa [#allocation3], 0
    // Predicated region
    $region2: #{tpu_custom_call.1} parent=1 // pred_check
      _
    $region3: #{tpu_custom_call.1} parent=1 // pred_check_branch
      %15 = sbr.rel (0) target = $region5
    $region4: #{tpu_custom_call.1} parent=1 // pred_region
      _
    $region5: #{tpu_custom_call.1} parent=1 // pred_fallthru
      _
    // Predicated region
    $region6: #{tpu_custom_call.1} parent=1 // pred_check
      _
    $region7: #{tpu_custom_call.1} parent=1 // pred_check_branch
      %17 = sbr.rel (0) target = $region9
    $region8: #{tpu_custom_call.1} parent=1 // pred_region
      %19 = vsyncadd [#allocation4], 0
      %s21 = sshll.u32 %s1, 4
      %s22 = int_to_ptr.vmem [resolvable:$true] %s21
      %24 = dma.vmem_to_smem %s22, 64, [#allocation2], [#allocation4]
    $region9: #{tpu_custom_call.1} parent=1 // pred_fallthru
      _
    // Predicated region
    $region10: #{tpu_custom_call.1} parent=1 // pred_check
      _
    $region11: #{tpu_custom_call.1} parent=1 // pred_check_branch
      %26 = sbr.rel (0) target = $region13
    $region12: #{tpu_custom_call.1} parent=1 // pred_region
      %28 = vsyncadd [#allocation6], 0
      %s30 = sshll.u32 %s2, 4
      %s31 = int_to_ptr.vmem [resolvable:$true] %s30
      %33 = dma.vmem_to_smem %s31, 16, [#allocation5], [#allocation6]
    $region13: #{tpu_custom_call.1} parent=1 // pred_fallthru
      _
    // Predicated region
    $region14: #{tpu_custom_call.1} parent=1 // pred_check
      _
    $region15: #{tpu_custom_call.1} parent=1 // pred_check_branch
      %35 = sbr.rel (0) target = $region17
    $region16: #{tpu_custom_call.1} parent=1 // pred_region
      %37 = vsyncadd [#allocation6], 0
      %s38 = sshll.u32 %s3, 4
      %s39 = int_to_ptr.vmem [resolvable:$true] %s38
      %44 = dma.vmem_to_smem %s39, 256, [#allocation7], [#allocation6], 128, 128, 8
    $region17: #{tpu_custom_call.1} parent=1 // pred_fallthru
      _
    // Predicated region
    $region18: #{tpu_custom_call.1} parent=1 // pred_check
      _
    $region19: #{tpu_custom_call.1} parent=1 // pred_check_branch
      %46 = sbr.rel (0) target = $region21
    $region20: #{tpu_custom_call.1} parent=1 // pred_region
      %48 = vsyncadd [#allocation9], 0
      %s50 = sshll.u32 %s4, 4
      %s51 = int_to_ptr.vmem [resolvable:$true] %s50
      %53 = dma.vmem_to_smem %s51, 16, [#allocation8], [#allocation9]
    $region21: #{tpu_custom_call.1} parent=1 // pred_fallthru
      _
    // Predicated region
    $region22: #{tpu_custom_call.1} parent=1 // pred_check
      _
    $region23: #{tpu_custom_call.1} parent=1 // pred_check_branch
      %55 = sbr.rel (0) target = $region25
    $region24: #{tpu_custom_call.1} parent=1 // pred_region
      %57 = dma.done [#allocation4], 64
    $region25: #{tpu_custom_call.1} parent=1 // pred_fallthru
      _
    // Predicated region
    $region26: #{tpu_custom_call.1} parent=1 // pred_check
      _
    $region27: #{tpu_custom_call.1} parent=1 // pred_check_branch
      %59 = sbr.rel (0) target = $region29
    $region28: #{tpu_custom_call.1} parent=1 // pred_region
      %61 = dma.done [#allocation6], 16
    $region29: #{tpu_custom_call.1} parent=1 // pred_fallthru
      _
    // Predicated region
    $region30: #{tpu_custom_call.1} parent=1 // pred_check
      _
    $region31: #{tpu_custom_call.1} parent=1 // pred_check_branch
      %63 = sbr.rel (0) target = $region33
    $region32: #{tpu_custom_call.1} parent=1 // pred_region
      %65 = dma.done [#allocation6], 256
    $region33: #{tpu_custom_call.1} parent=1 // pred_fallthru
      _
    // Predicated region
    $region34: #{tpu_custom_call.1} parent=1 // pred_check
      _
    $region35: #{tpu_custom_call.1} parent=1 // pred_check_branch
      %67 = sbr.rel (0) target = $region37
    $region36: #{tpu_custom_call.1} parent=1 // pred_region
      %69 = dma.done [#allocation9], 16
    $region37: #{tpu_custom_call.1} parent=1 // pred_fallthru
      _
    %70 = sfence
    %v71 = vld [vmem:[%s0] sm:$0x1]
    %v72 = vld [vmem:[%s0 + $0x1] sm:$0x1]
    %v73 = vld [vmem:[%s0 + $0x2] sm:$0x1]
    %s74 = sld [smem:[#allocation2]]
    %v75 = vstv %s74
    %v76 = vmul.f32 %v71, %v75
    %s77 = sld [smem:[#allocation5]]
    %v78 = vstv %s77
    %v79 = vadd.f32 %v76, %v78
    %s80 = sld [smem:[#allocation2 + $0x80]]
    %v81 = vstv %s80
    %v82 = vmul.f32 %v72, %v81
    %v83 = vadd.f32 %v79, %v82
    %s84 = sld [smem:[#allocation2 + $0x100]]
    %v85 = vstv %s84
    %v86 = vmul.f32 %v73, %v85
    %v87 = vadd.f32 %v83, %v86
    %v88 = vmax.f32 %v87, 0.0
    %s89 = sld [smem:[#allocation2 + $0x1]]
    %v90 = vstv %s89
    %v91 = vmul.f32 %v71, %v90
    %s92 = sld [smem:[#allocation5 + $0x1]]
    %v93 = vstv %s92
    %v94 = vadd.f32 %v91, %v93
    %s95 = sld [smem:[#allocation2 + $0x81]]
    %v96 = vstv %s95
    %v97 = vmul.f32 %v72, %v96
    %v98 = vadd.f32 %v94, %v97
    %s99 = sld [smem:[#allocation2 + $0x101]]
    %v100 = vstv %s99
    %v101 = vmul.f32 %v73, %v100
    %v102 = vadd.f32 %v98, %v101
    %v103 = vmax.f32 %v102, 0.0
    %s104 = sld [smem:[#allocation2 + $0x2]]
    %v105 = vstv %s104
    %v106 = vmul.f32 %v71, %v105
    %s107 = sld [smem:[#allocation5 + $0x2]]
    %v108 = vstv %s107
    %v109 = vadd.f32 %v106, %v108
    %s110 = sld [smem:[#allocation2 + $0x82]]
    %v111 = vstv %s110
    %v112 = vmul.f32 %v72, %v111
    %v113 = vadd.f32 %v109, %v112
    %s114 = sld [smem:[#allocation2 + $0x102]]
    %v115 = vstv %s114
    %v116 = vmul.f32 %v73, %v115
    %v117 = vadd.f32 %v113, %v116
    %v118 = vmax.f32 %v117, 0.0
    %s119 = sld [smem:[#allocation2 + $0x3]]
    %v120 = vstv %s119
    %v121 = vmul.f32 %v71, %v120
    %s122 = sld [smem:[#allocation5 + $0x3]]
    %v123 = vstv %s122
    %v124 = vadd.f32 %v121, %v123
    %s125 = sld [smem:[#allocation2 + $0x83]]
    %v126 = vstv %s125
    %v127 = vmul.f32 %v72, %v126
    %v128 = vadd.f32 %v124, %v127
    %s129 = sld [smem:[#allocation2 + $0x103]]
    %v130 = vstv %s129
    %v131 = vmul.f32 %v73, %v130
    %v132 = vadd.f32 %v128, %v131
    %v133 = vmax.f32 %v132, 0.0
    %s134 = sld [smem:[#allocation2 + $0x4]]
    %v135 = vstv %s134
    %v136 = vmul.f32 %v71, %v135
    %s137 = sld [smem:[#allocation5 + $0x4]]
    %v138 = vstv %s137
    %v139 = vadd.f32 %v136, %v138
    %s140 = sld [smem:[#allocation2 + $0x84]]
    %v141 = vstv %s140
    %v142 = vmul.f32 %v72, %v141
    %v143 = vadd.f32 %v139, %v142
    %s144 = sld [smem:[#allocation2 + $0x104]]
    %v145 = vstv %s144
    %v146 = vmul.f32 %v73, %v145
    %v147 = vadd.f32 %v143, %v146
    %v148 = vmax.f32 %v147, 0.0
    %s149 = sld [smem:[#allocation2 + $0x5]]
    %v150 = vstv %s149
    %v151 = vmul.f32 %v71, %v150
    %s152 = sld [smem:[#allocation5 + $0x5]]
    %v153 = vstv %s152
    %v154 = vadd.f32 %v151, %v153
    %s155 = sld [smem:[#allocation2 + $0x85]]
    %v156 = vstv %s155
    %v157 = vmul.f32 %v72, %v156
    %v158 = vadd.f32 %v154, %v157
    %s159 = sld [smem:[#allocation2 + $0x105]]
    %v160 = vstv %s159
    %v161 = vmul.f32 %v73, %v160
    %v162 = vadd.f32 %v158, %v161
    %v163 = vmax.f32 %v162, 0.0
    %s164 = sld [smem:[#allocation2 + $0x6]]
    %v165 = vstv %s164
    %v166 = vmul.f32 %v71, %v165
    %s167 = sld [smem:[#allocation5 + $0x6]]
    %v168 = vstv %s167
    %v169 = vadd.f32 %v166, %v168
    %s170 = sld [smem:[#allocation2 + $0x86]]
    %v171 = vstv %s170
    %v172 = vmul.f32 %v72, %v171
    %v173 = vadd.f32 %v169, %v172
    %s174 = sld [smem:[#allocation2 + $0x106]]
    %v175 = vstv %s174
    %v176 = vmul.f32 %v73, %v175
    %v177 = vadd.f32 %v173, %v176
    %v178 = vmax.f32 %v177, 0.0
    %s179 = sld [smem:[#allocation2 + $0x7]]
    %v180 = vstv %s179
    %v181 = vmul.f32 %v71, %v180
    %s182 = sld [smem:[#allocation5 + $0x7]]
    %v183 = vstv %s182
    %v184 = vadd.f32 %v181, %v183
    %s185 = sld [smem:[#allocation2 + $0x87]]
    %v186 = vstv %s185
    %v187 = vmul.f32 %v72, %v186
    %v188 = vadd.f32 %v184, %v187
    %s189 = sld [smem:[#allocation2 + $0x107]]
    %v190 = vstv %s189
    %v191 = vmul.f32 %v73, %v190
    %v192 = vadd.f32 %v188, %v191
    %v193 = vmax.f32 %v192, 0.0
    %s194 = sld [smem:[#allocation2 + $0x8]]
    %v195 = vstv %s194
    %v196 = vmul.f32 %v71, %v195
    %s197 = sld [smem:[#allocation5 + $0x8]]
    %v198 = vstv %s197
    %v199 = vadd.f32 %v196, %v198
    %s200 = sld [smem:[#allocation2 + $0x88]]
    %v201 = vstv %s200
    %v202 = vmul.f32 %v72, %v201
    %v203 = vadd.f32 %v199, %v202
    %s204 = sld [smem:[#allocation2 + $0x108]]
    %v205 = vstv %s204
    %v206 = vmul.f32 %v73, %v205
    %v207 = vadd.f32 %v203, %v206
    %v208 = vmax.f32 %v207, 0.0
    %s209 = sld [smem:[#allocation2 + $0x9]]
    %v210 = vstv %s209
    %v211 = vmul.f32 %v71, %v210
    %s212 = sld [smem:[#allocation5 + $0x9]]
    %v213 = vstv %s212
    %v214 = vadd.f32 %v211, %v213
    %s215 = sld [smem:[#allocation2 + $0x89]]
    %v216 = vstv %s215
    %v217 = vmul.f32 %v72, %v216
    %v218 = vadd.f32 %v214, %v217
    %s219 = sld [smem:[#allocation2 + $0x109]]
    %v220 = vstv %s219
    %v221 = vmul.f32 %v73, %v220
    %v222 = vadd.f32 %v218, %v221
    %v223 = vmax.f32 %v222, 0.0
    %s224 = sld [smem:[#allocation7]]
    %v225 = vstv %s224
    %v226 = vmul.f32 %v88, %v225
    %s227 = sld [smem:[#allocation8]]
    %v228 = vstv %s227
    %v229 = vadd.f32 %v226, %v228
    %s230 = sld [smem:[#allocation7 + $0x80]]
    %v231 = vstv %s230
    %v232 = vmul.f32 %v103, %v231
    %v233 = vadd.f32 %v229, %v232
    %s234 = sld [smem:[#allocation7 + $0x100]]
    %v235 = vstv %s234
    %v236 = vmul.f32 %v118, %v235
    %v237 = vadd.f32 %v233, %v236
    %s238 = sld [smem:[#allocation7 + $0x180]]
    %v239 = vstv %s238
    %v240 = vmul.f32 %v133, %v239
    %v241 = vadd.f32 %v237, %v240
    %s242 = sld [smem:[#allocation7 + $0x200]]
    %v243 = vstv %s242
    %v244 = vmul.f32 %v148, %v243
    %v245 = vadd.f32 %v241, %v244
    %s246 = sld [smem:[#allocation7 + $0x280]]
    %v247 = vstv %s246
    %v248 = vmul.f32 %v163, %v247
    %v249 = vadd.f32 %v245, %v248
    %s250 = sld [smem:[#allocation7 + $0x300]]
    %v251 = vstv %s250
    %v252 = vmul.f32 %v178, %v251
    %v253 = vadd.f32 %v249, %v252
    %s254 = sld [smem:[#allocation7 + $0x380]]
    %v255 = vstv %s254
    %v256 = vmul.f32 %v193, %v255
    %v257 = vadd.f32 %v253, %v256
    %s258 = sld [smem:[#allocation7 + $0x400]]
    %v259 = vstv %s258
    %v260 = vmul.f32 %v208, %v259
    %v261 = vadd.f32 %v257, %v260
    %s262 = sld [smem:[#allocation7 + $0x480]]
    %v263 = vstv %s262
    %v264 = vmul.f32 %v223, %v263
    %v265 = vadd.f32 %v261, %v264
    %vm266 = vcmask 155648
    %267 = vst.msk [vmem:[#allocation10] sm:$0x1] %vm266, %v265
    %s268 = sld [smem:[#allocation7 + $0x1]]
    %v269 = vstv %s268
    %v270 = vmul.f32 %v88, %v269
    %s271 = sld [smem:[#allocation8 + $0x1]]
    %v272 = vstv %s271
    %v273 = vadd.f32 %v270, %v272
    %s274 = sld [smem:[#allocation7 + $0x81]]
    %v275 = vstv %s274
    %v276 = vmul.f32 %v103, %v275
    %v277 = vadd.f32 %v273, %v276
    %s278 = sld [smem:[#allocation7 + $0x101]]
    %v279 = vstv %s278
    %v280 = vmul.f32 %v118, %v279
    %v281 = vadd.f32 %v277, %v280
    %s282 = sld [smem:[#allocation7 + $0x181]]
    %v283 = vstv %s282
    %v284 = vmul.f32 %v133, %v283
    %v285 = vadd.f32 %v281, %v284
    %s286 = sld [smem:[#allocation7 + $0x201]]
    %v287 = vstv %s286
    %v288 = vmul.f32 %v148, %v287
    %v289 = vadd.f32 %v285, %v288
    %s290 = sld [smem:[#allocation7 + $0x281]]
    %v291 = vstv %s290
    %v292 = vmul.f32 %v163, %v291
    %v293 = vadd.f32 %v289, %v292
    %s294 = sld [smem:[#allocation7 + $0x301]]
    %v295 = vstv %s294
    %v296 = vmul.f32 %v178, %v295
    %v297 = vadd.f32 %v293, %v296
    %s298 = sld [smem:[#allocation7 + $0x381]]
    %v299 = vstv %s298
    %v300 = vmul.f32 %v193, %v299
    %v301 = vadd.f32 %v297, %v300
    %s302 = sld [smem:[#allocation7 + $0x401]]
    %v303 = vstv %s302
    %v304 = vmul.f32 %v208, %v303
    %v305 = vadd.f32 %v301, %v304
    %s306 = sld [smem:[#allocation7 + $0x481]]
    %v307 = vstv %s306
    %v308 = vmul.f32 %v223, %v307
    %v309 = vadd.f32 %v305, %v308
    %310 = vst.msk [vmem:[#allocation10 + $0x1] sm:$0x1] %vm266, %v309
    %s311 = sld [smem:[#allocation7 + $0x2]]
    %v312 = vstv %s311
    %v313 = vmul.f32 %v88, %v312
    %s314 = sld [smem:[#allocation8 + $0x2]]
    %v315 = vstv %s314
    %v316 = vadd.f32 %v313, %v315
    %s317 = sld [smem:[#allocation7 + $0x82]]
    %v318 = vstv %s317
    %v319 = vmul.f32 %v103, %v318
    %v320 = vadd.f32 %v316, %v319
    %s321 = sld [smem:[#allocation7 + $0x102]]
    %v322 = vstv %s321
    %v323 = vmul.f32 %v118, %v322
    %v324 = vadd.f32 %v320, %v323
    %s325 = sld [smem:[#allocation7 + $0x182]]
    %v326 = vstv %s325
    %v327 = vmul.f32 %v133, %v326
    %v328 = vadd.f32 %v324, %v327
    %s329 = sld [smem:[#allocation7 + $0x202]]
    %v330 = vstv %s329
    %v331 = vmul.f32 %v148, %v330
    %v332 = vadd.f32 %v328, %v331
    %s333 = sld [smem:[#allocation7 + $0x282]]
    %v334 = vstv %s333
    %v335 = vmul.f32 %v163, %v334
    %v336 = vadd.f32 %v332, %v335
    %s337 = sld [smem:[#allocation7 + $0x302]]
    %v338 = vstv %s337
    %v339 = vmul.f32 %v178, %v338
    %v340 = vadd.f32 %v336, %v339
    %s341 = sld [smem:[#allocation7 + $0x382]]
    %v342 = vstv %s341
    %v343 = vmul.f32 %v193, %v342
    %v344 = vadd.f32 %v340, %v343
    %s345 = sld [smem:[#allocation7 + $0x402]]
    %v346 = vstv %s345
    %v347 = vmul.f32 %v208, %v346
    %v348 = vadd.f32 %v344, %v347
    %s349 = sld [smem:[#allocation7 + $0x482]]
    %v350 = vstv %s349
    %v351 = vmul.f32 %v223, %v350
    %v352 = vadd.f32 %v348, %v351
    %353 = vst.msk [vmem:[#allocation10 + $0x2] sm:$0x1] %vm266, %v352
    %s354 = sld [smem:[#allocation7 + $0x3]]
    %v355 = vstv %s354
    %v356 = vmul.f32 %v88, %v355
    %s357 = sld [smem:[#allocation8 + $0x3]]
    %v358 = vstv %s357
    %v359 = vadd.f32 %v356, %v358
    %s360 = sld [smem:[#allocation7 + $0x83]]
    %v361 = vstv %s360
    %v362 = vmul.f32 %v103, %v361
    %v363 = vadd.f32 %v359, %v362
    %s364 = sld [smem:[#allocation7 + $0x103]]
    %v365 = vstv %s364
    %v366 = vmul.f32 %v118, %v365
    %v367 = vadd.f32 %v363, %v366
    %s368 = sld [smem:[#allocation7 + $0x183]]
    %v369 = vstv %s368
    %v370 = vmul.f32 %v133, %v369
    %v371 = vadd.f32 %v367, %v370
    %s372 = sld [smem:[#allocation7 + $0x203]]
    %v373 = vstv %s372
    %v374 = vmul.f32 %v148, %v373
    %v375 = vadd.f32 %v371, %v374
    %s376 = sld [smem:[#allocation7 + $0x283]]
    %v377 = vstv %s376
    %v378 = vmul.f32 %v163, %v377
    %v379 = vadd.f32 %v375, %v378
    %s380 = sld [smem:[#allocation7 + $0x303]]
    %v381 = vstv %s380
    %v382 = vmul.f32 %v178, %v381
    %v383 = vadd.f32 %v379, %v382
    %s384 = sld [smem:[#allocation7 + $0x383]]
    %v385 = vstv %s384
    %v386 = vmul.f32 %v193, %v385
    %v387 = vadd.f32 %v383, %v386
    %s388 = sld [smem:[#allocation7 + $0x403]]
    %v389 = vstv %s388
    %v390 = vmul.f32 %v208, %v389
    %v391 = vadd.f32 %v387, %v390
    %s392 = sld [smem:[#allocation7 + $0x483]]
    %v393 = vstv %s392
    %v394 = vmul.f32 %v223, %v393
    %v395 = vadd.f32 %v391, %v394
    %396 = vst.msk [vmem:[#allocation10 + $0x3] sm:$0x1] %vm266, %v395
    %s397 = sld [smem:[#allocation7 + $0x4]]
    %v398 = vstv %s397
    %v399 = vmul.f32 %v88, %v398
    %s400 = sld [smem:[#allocation8 + $0x4]]
    %v401 = vstv %s400
    %v402 = vadd.f32 %v399, %v401
    %s403 = sld [smem:[#allocation7 + $0x84]]
    %v404 = vstv %s403
    %v405 = vmul.f32 %v103, %v404
    %v406 = vadd.f32 %v402, %v405
    %s407 = sld [smem:[#allocation7 + $0x104]]
    %v408 = vstv %s407
    %v409 = vmul.f32 %v118, %v408
    %v410 = vadd.f32 %v406, %v409
    %s411 = sld [smem:[#allocation7 + $0x184]]
    %v412 = vstv %s411
    %v413 = vmul.f32 %v133, %v412
    %v414 = vadd.f32 %v410, %v413
    %s415 = sld [smem:[#allocation7 + $0x204]]
    %v416 = vstv %s415
    %v417 = vmul.f32 %v148, %v416
    %v418 = vadd.f32 %v414, %v417
    %s419 = sld [smem:[#allocation7 + $0x284]]
    %v420 = vstv %s419
    %v421 = vmul.f32 %v163, %v420
    %v422 = vadd.f32 %v418, %v421
    %s423 = sld [smem:[#allocation7 + $0x304]]
    %v424 = vstv %s423
    %v425 = vmul.f32 %v178, %v424
    %v426 = vadd.f32 %v422, %v425
    %s427 = sld [smem:[#allocation7 + $0x384]]
    %v428 = vstv %s427
    %v429 = vmul.f32 %v193, %v428
    %v430 = vadd.f32 %v426, %v429
    %s431 = sld [smem:[#allocation7 + $0x404]]
    %v432 = vstv %s431
    %v433 = vmul.f32 %v208, %v432
    %v434 = vadd.f32 %v430, %v433
    %s435 = sld [smem:[#allocation7 + $0x484]]
    %v436 = vstv %s435
    %v437 = vmul.f32 %v223, %v436
    %v438 = vadd.f32 %v434, %v437
    %439 = vst.msk [vmem:[#allocation10 + $0x4] sm:$0x1] %vm266, %v438
    %s440 = sld [smem:[#allocation7 + $0x5]]
    %v441 = vstv %s440
    %v442 = vmul.f32 %v88, %v441
    %s443 = sld [smem:[#allocation8 + $0x5]]
    %v444 = vstv %s443
    %v445 = vadd.f32 %v442, %v444
    %s446 = sld [smem:[#allocation7 + $0x85]]
    %v447 = vstv %s446
    %v448 = vmul.f32 %v103, %v447
    %v449 = vadd.f32 %v445, %v448
    %s450 = sld [smem:[#allocation7 + $0x105]]
    %v451 = vstv %s450
    %v452 = vmul.f32 %v118, %v451
    %v453 = vadd.f32 %v449, %v452
    %s454 = sld [smem:[#allocation7 + $0x185]]
    %v455 = vstv %s454
    %v456 = vmul.f32 %v133, %v455
    %v457 = vadd.f32 %v453, %v456
    %s458 = sld [smem:[#allocation7 + $0x205]]
    %v459 = vstv %s458
    %v460 = vmul.f32 %v148, %v459
    %v461 = vadd.f32 %v457, %v460
    %s462 = sld [smem:[#allocation7 + $0x285]]
    %v463 = vstv %s462
    %v464 = vmul.f32 %v163, %v463
    %v465 = vadd.f32 %v461, %v464
    %s466 = sld [smem:[#allocation7 + $0x305]]
    %v467 = vstv %s466
    %v468 = vmul.f32 %v178, %v467
    %v469 = vadd.f32 %v465, %v468
    %s470 = sld [smem:[#allocation7 + $0x385]]
    %v471 = vstv %s470
    %v472 = vmul.f32 %v193, %v471
    %v473 = vadd.f32 %v469, %v472
    %s474 = sld [smem:[#allocation7 + $0x405]]
    %v475 = vstv %s474
    %v476 = vmul.f32 %v208, %v475
    %v477 = vadd.f32 %v473, %v476
    %s478 = sld [smem:[#allocation7 + $0x485]]
    %v479 = vstv %s478
    %v480 = vmul.f32 %v223, %v479
    %v481 = vadd.f32 %v477, %v480
    %482 = vst.msk [vmem:[#allocation10 + $0x5] sm:$0x1] %vm266, %v481
    // Predicated region
    $region38: #{tpu_custom_call.1} parent=1 // pred_check
      _
    $region39: #{tpu_custom_call.1} parent=1 // pred_check_branch
      %484 = sbr.rel (0) target = $region41
    $region40: #{tpu_custom_call.1} parent=1 // pred_region
      %486 = vsyncadd [#allocation3], 0
      %s488 = sshll.u32 [#allocation10], 4
      %s489 = int_to_ptr.vmem [resolvable:$true] %s488
      %s490 = sshll.u32 %s5, 4
      %s491 = int_to_ptr.hbm [resolvable:$true] %s490
      %493 = dma.vmem_to_hbm [thread:$0]  %s489, 128, %s491, [#allocation3]
    $region41: #{tpu_custom_call.1} parent=1 // pred_fallthru
      _
    // Predicated region
    $region42: #{tpu_custom_call.1} parent=1 // pred_check
      _
    $region43: #{tpu_custom_call.1} parent=1 // pred_check_branch
      %495 = sbr.rel (0) target = $region45
    $region44: #{tpu_custom_call.1} parent=1 // pred_region
      %497 = dma.done [#allocation3], 128
    $region45: #{tpu_custom_call.1} parent=1 // pred_fallthru
      _
    %498 = vsyncpa [#allocation3], 1
    %499 = vsyncpa [#allocation4], 1
    %500 = vsyncpa [#allocation6], 1
    %501 = vsyncpa [#allocation9], 1

</llo_original>
